<compile_context>
chip_gen: v7x
topology: tpu7x:2x2x1
jax: 0.10.0
libtpu: 0.0.40
codegen_flags: <defaults>
</compile_context>

<pallas_src>
import functools

import jax
import jax.numpy as jnp
from jax.experimental import pallas as pl
from jax.experimental.pallas import tpu as pltpu


def _round_up(n: int, m: int) -> int:
    return ((n + m - 1) // m) * m


_COMPILER_PARAMS = pltpu.CompilerParams(
    dimension_semantics=("parallel",),       # every grid here is order-independent
    vmem_limit_bytes=32 * 1024 * 1024,       # raise v5e's 16 MiB default; safe on all gens
)


# ---------------------------------------------------------------------------
# Kernel 1: embedding (one-hot matmul) + PreNet (Linear+ReLU, Linear+ReLU)
# ---------------------------------------------------------------------------
def _embed_prenet_kernel(idx_ref, tab_ref, w1_ref, b1_ref, w2_ref, b2_ref,
                         o_ref, *, compute_dtype):
    tm = idx_ref.shape[0]
    v_pad = tab_ref.shape[0]

    idx = idx_ref[...]                                           # (tm, 1) int32
    iota = jax.lax.broadcasted_iota(jnp.int32, (tm, v_pad), 1)
    onehot = (idx == iota).astype(compute_dtype)                 # (tm, V_pad)

    emb = jnp.dot(onehot, tab_ref[...],
                  preferred_element_type=jnp.float32)            # (tm, D)

    h = jnp.dot(emb.astype(compute_dtype), w1_ref[...],
                preferred_element_type=jnp.float32) + b1_ref[...]
    h = jnp.maximum(h, 0.0)
    # TODO(synk): training-mode dropout omitted (eval-mode nn.Dropout == identity).
    y = jnp.dot(h.astype(compute_dtype), w2_ref[...],
                preferred_element_type=jnp.float32) + b2_ref[...]
    y = jnp.maximum(y, 0.0)

    o_ref[...] = y.astype(o_ref.dtype)


def _embed_prenet(tokens, params, *, compute_dtype, tile_m):
    B, T = tokens.shape
    V, D = params["emb"].shape
    H = params["w1"].shape[1]
    D_out = params["w2"].shape[1]

    N = B * T
    tm = _round_up(min(tile_m, _round_up(N, 8)), 8)
    N_pad = _round_up(N, tm)
    V_pad = _round_up(V, 128)

    idx = tokens.reshape(N, 1).astype(jnp.int32)
    if N_pad != N:
        idx = jnp.pad(idx, ((0, N_pad - N), (0, 0)))
    table = params["emb"].astype(compute_dtype)
    if V_pad != V:
        table = jnp.pad(table, ((0, V_pad - V), (0, 0)))

    w1 = params["w1"].astype(compute_dtype)
    w2 = params["w2"].astype(compute_dtype)
    b1 = params["b1"].reshape(1, H).astype(jnp.float32)
    b2 = params["b2"].reshape(1, D_out).astype(jnp.float32)

    out = pl.pallas_call(
        functools.partial(_embed_prenet_kernel, compute_dtype=compute_dtype),
        out_shape=jax.ShapeDtypeStruct((N_pad, D_out), jnp.float32),
        grid=(N_pad // tm,),
        in_specs=[
            pl.BlockSpec((tm, 1), lambda i: (i, 0)),
            pl.BlockSpec((V_pad, D), lambda i: (0, 0)),
            pl.BlockSpec((D, H), lambda i: (0, 0)),
            pl.BlockSpec((1, H), lambda i: (0, 0)),
            pl.BlockSpec((H, D_out), lambda i: (0, 0)),
            pl.BlockSpec((1, D_out), lambda i: (0, 0)),
        ],
        out_specs=pl.BlockSpec((tm, D_out), lambda i: (i, 0)),
        compiler_params=_COMPILER_PARAMS,
    )(idx, table, w1, b1, w2, b2)

    return out[:N].reshape(B, T, D_out)


# ---------------------------------------------------------------------------
# Kernel 2: Conv1d(k=5, s=1, p=2) + bias + ReLU + InstanceNorm1d
# ---------------------------------------------------------------------------
def _conv_block_kernel(x_ref, w_ref, b_ref, o_ref, *, relu, inorm, eps,
                       compute_dtype):
    T = o_ref.shape[1]
    K = w_ref.shape[0]
    C_out = o_ref.shape[2]

    acc = jnp.zeros((T, C_out), jnp.float32)
    for k in range(K):                                      # static unroll (K = 5)
        xk = x_ref[0, k:k + T, :].astype(compute_dtype)     # (T, C_in), shifted
        acc = acc + jnp.dot(xk, w_ref[k], preferred_element_type=jnp.float32)
    y = acc + b_ref[...]

    if relu:
        y = jnp.maximum(y, 0.0)
    if inorm:  # InstanceNorm1d(affine=False): normalize over time, per channel
        mean = jnp.mean(y, axis=0, keepdims=True)
        var = jnp.mean(jnp.square(y - mean), axis=0, keepdims=True)
        y = (y - mean) * jax.lax.rsqrt(var + eps)

    o_ref[0] = y.astype(o_ref.dtype)


def _conv1d_block(x, w, b, *, relu, inorm, eps=1e-5, compute_dtype):
    B, T, C_in = x.shape
    K, _, C_out = w.shape
    pad = (K - 1) // 2
    x_pad = jnp.pad(x, ((0, 0), (pad, pad), (0, 0)))
    Tp = T + 2 * pad

    return pl.pallas_call(
        functools.partial(_conv_block_kernel, relu=relu, inorm=inorm, eps=eps,
                          compute_dtype=compute_dtype),
        out_shape=jax.ShapeDtypeStruct((B, T, C_out), jnp.float32),
        grid=(B,),
        in_specs=[
            pl.BlockSpec((1, Tp, C_in), lambda bi: (bi, 0, 0)),
            pl.BlockSpec((K, C_in, C_out), lambda bi: (0, 0, 0)),
            pl.BlockSpec((1, C_out), lambda bi: (0, 0)),
        ],
        out_specs=pl.BlockSpec((1, T, C_out), lambda bi: (bi, 0, 0)),
        compiler_params=_COMPILER_PARAMS,
    )(x_pad, w.astype(compute_dtype), b.reshape(1, C_out).astype(jnp.float32))


# ---------------------------------------------------------------------------
# Kernel 3: ConvTranspose1d(k=4, s=2, p=1) + bias  (T -> 2*T upsample)
# ---------------------------------------------------------------------------
def _conv_transpose_kernel(x_ref, w_ref, b_ref, o_ref, *, compute_dtype):
    T = o_ref.shape[1]
    C_out = o_ref.shape[2] // 2

    xc = x_ref[0, 1:T + 1, :].astype(compute_dtype)   # x[j]
    xm = x_ref[0, 0:T, :].astype(compute_dtype)       # x[j-1] (zero padded)
    xn = x_ref[0, 2:T + 2, :].astype(compute_dtype)   # x[j+1] (zero padded)
    b = b_ref[...]

    # y[2j]   = x[j] @ W[1] + x[j-1] @ W[3] + b
    # y[2j+1] = x[j] @ W[2] + x[j+1] @ W[0] + b
    ye = (jnp.dot(xc, w_ref[1], preferred_element_type=jnp.float32)
          + jnp.dot(xm, w_ref[3], preferred_element_type=jnp.float32) + b)
    yo = (jnp.dot(xc, w_ref[2], preferred_element_type=jnp.float32)
          + jnp.dot(xn, w_ref[0], preferred_element_type=jnp.float32) + b)

    o_ref[0, :, :C_out] = ye.astype(o_ref.dtype)
    o_ref[0, :, C_out:] = yo.astype(o_ref.dtype)


def _conv_transpose1d_x2(x, w, b, *, compute_dtype):
    B, T, C_in = x.shape
    K, _, C_out = w.shape
    assert K == 4, "module uses ConvTranspose1d(kernel_size=4, stride=2, padding=1)"
    x_pad = jnp.pad(x, ((0, 0), (1, 1), (0, 0)))

    pairs = pl.pallas_call(
        functools.partial(_conv_transpose_kernel, compute_dtype=compute_dtype),
        out_shape=jax.ShapeDtypeStruct((B, T, 2 * C_out), jnp.float32),
        grid=(B,),
        in_specs=[
            pl.BlockSpec((1, T + 2, C_in), lambda bi: (bi, 0, 0)),
            pl.BlockSpec((K, C_in, C_out), lambda bi: (0, 0, 0)),
            pl.BlockSpec((1, C_out), lambda bi: (0, 0)),
        ],
        out_specs=pl.BlockSpec((1, T, 2 * C_out), lambda bi: (bi, 0, 0)),
        compiler_params=_COMPILER_PARAMS,
    )(x_pad, w.astype(compute_dtype), b.reshape(1, C_out).astype(jnp.float32))

    # Row-major (B, T, 2*C) -> (B, 2*T, C) interleaves even/odd output phases.
    return pairs.reshape(B, 2 * T, C_out)


# ---------------------------------------------------------------------------
# Full Encoder forward
# ---------------------------------------------------------------------------
def encoder_forward(tokens, params, *, compute_dtype=jnp.bfloat16, tile_m=256):
    """tokens: (B, T) int32 codebook ids.  Returns (B, 2*T, 512) float32."""
    if tokens.ndim != 2:
        raise ValueError(f"Expected (batch, time) token ids, got ndim={tokens.ndim}")
    x = _embed_prenet(tokens, params, compute_dtype=compute_dtype, tile_m=tile_m)
    x = _conv1d_block(x, params["cw1"], params["cb1"], relu=True, inorm=True,
                      compute_dtype=compute_dtype)
    x = _conv_transpose1d_x2(x, params["tw"], params["tb"],
                             compute_dtype=compute_dtype)
    x = _conv1d_block(x, params["cw2"], params["cb2"], relu=True, inorm=True,
                      compute_dtype=compute_dtype)
    x = _conv1d_block(x, params["cw3"], params["cb3"], relu=True, inorm=True,
                      compute_dtype=compute_dtype)
    return x


def init_encoder_params(key, *, codebook_size=100, emb_dim=256, conv_dim=512,
                        dtype=jnp.float32):
    """Synthetic deterministic params.  Linear weights are (in, out); conv /
    conv-transpose weights are (K, C_in, C_out)."""
    ks = jax.random.split(key, 13)

    def unif(k, shape, fan_in):
        s = 1.0 / (fan_in ** 0.5)
        return jax.random.uniform(k, shape, dtype, -s, s)

    V = codebook_size + 1
    return {
        "emb": jax.random.normal(ks[0], (V, emb_dim), dtype),
        "w1": unif(ks[1], (emb_dim, emb_dim), emb_dim),
        "b1": unif(ks[2], (emb_dim,), emb_dim),
        "w2": unif(ks[3], (emb_dim, emb_dim), emb_dim),
        "b2": unif(ks[4], (emb_dim,), emb_dim),
        "cw1": unif(ks[5], (5, emb_dim, conv_dim), 5 * emb_dim),
        "cb1": unif(ks[6], (conv_dim,), 5 * emb_dim),
        "tw": unif(ks[7], (4, conv_dim, conv_dim), 4 * conv_dim),
        "tb": unif(ks[8], (conv_dim,), 4 * conv_dim),
        "cw2": unif(ks[9], (5, conv_dim, conv_dim), 5 * conv_dim),
        "cb2": unif(ks[10], (conv_dim,), 5 * conv_dim),
        "cw3": unif(ks[11], (5, conv_dim, conv_dim), 5 * conv_dim),
        "cb3": unif(ks[12], (conv_dim,), 5 * conv_dim),
    }


# ---------------------------------------------------------------------------
# Plain-JAX eval-mode reference (f32)
# ---------------------------------------------------------------------------
_HI = jax.lax.Precision.HIGHEST


def _conv_ref(x, w, b, *, relu, inorm, eps=1e-5):
    K, _, C_out = w.shape
    pad = (K - 1) // 2
    B, T, _ = x.shape
    xp = jnp.pad(x, ((0, 0), (pad, pad), (0, 0)))
    y = jnp.zeros((B, T, C_out), jnp.float32) + b
    for k in range(K):
        y = y + jnp.einsum("btc,cd->btd", xp[:, k:k + T, :], w[k], precision=_HI)
    if relu:
        y = jnp.maximum(y, 0.0)
    if inorm:
        mean = jnp.mean(y, axis=1, keepdims=True)
        var = jnp.mean(jnp.square(y - mean), axis=1, keepdims=True)
        y = (y - mean) * jax.lax.rsqrt(var + eps)
    return y


def _conv_transpose_ref(x, w, b):
    B, T, _ = x.shape
    C_out = w.shape[2]
    xp = jnp.pad(x, ((0, 0), (1, 1), (0, 0)))
    xc, xm, xn = xp[:, 1:T + 1], xp[:, 0:T], xp[:, 2:T + 2]
    mm = lambda a, wk: jnp.einsum("btc,cd->btd", a, wk, precision=_HI)
    ye = mm(xc, w[1]) + mm(xm, w[3]) + b
    yo = mm(xc, w[2]) + mm(xn, w[0]) + b
    return jnp.stack([ye, yo], axis=2).reshape(B, 2 * T, C_out)


def encoder_reference(tokens, params):
    emb = params["emb"][tokens]
    B, T, D = emb.shape
    h = emb.reshape(B * T, D)
    h = jnp.maximum(jnp.dot(h, params["w1"], precision=_HI) + params["b1"], 0.0)
    h = jnp.maximum(jnp.dot(h, params["w2"], precision=_HI) + params["b2"], 0.0)
    x = h.reshape(B, T, -1)
    x = _conv_ref(x, params["cw1"], params["cb1"], relu=True, inorm=True)
    x = _conv_transpose_ref(x, params["tw"], params["tb"])
    x = _conv_ref(x, params["cw2"], params["cb2"], relu=True, inorm=True)
    x = _conv_ref(x, params["cw3"], params["cb3"], relu=True, inorm=True)
    return x


if __name__ == "__main__":
    key = jax.random.PRNGKey(0)
    k_params, k_tok = jax.random.split(key)

    codebook_size = 100     # Encoder default; channel widths are fixed by the module
    B, T = 2, 8

    params = init_encoder_params(k_params, codebook_size=codebook_size)
    tokens = jax.random.randint(k_tok, (B, T), 0, codebook_size + 1, dtype=jnp.int32)

    y_ref = encoder_reference(tokens, params)

    # f32 compute path: structural check against the plain-JAX reference.
    y32 = jax.block_until_ready(
        encoder_forward(tokens, params, compute_dtype=jnp.float32))
    assert y32.shape == (B, 2 * T, 512), y32.shape
    err32 = float(jnp.max(jnp.abs(y32 - y_ref) / (1.0 + jnp.abs(y_ref))))
    assert err32 < 5e-2, f"f32 path mismatch: {err32}"

    # Default bf16-MXU path (f32 accumulation): looser tolerance.
    y = jax.block_until_ready(
        encoder_forward(tokens, params, compute_dtype=jnp.bfloat16))
    assert y.shape == (B, 2 * T, 512), y.shape
    err = float(jnp.max(jnp.abs(y - y_ref) / (1.0 + jnp.abs(y_ref))))
    assert err < 0.15, f"bf16 path mismatch: {err}"

    print("KERNEL_OK")
</pallas_src>

<mosaic_0001>
module attributes {stable_mosaic.version = 11 : i64} {
  func.func @_embed_prenet_kernel(%arg0: i32, %arg1: memref<16x1xi32, #tpu.memory_space<vmem>>, %arg2: memref<128x256xf32, #tpu.memory_space<vmem>>, %arg3: memref<256x256xf32, #tpu.memory_space<vmem>>, %arg4: memref<1x256xf32, #tpu.memory_space<vmem>>, %arg5: memref<256x256xf32, #tpu.memory_space<vmem>>, %arg6: memref<1x256xf32, #tpu.memory_space<vmem>>, %arg7: memref<16x256xf32, #tpu.memory_space<vmem>>) attributes {dimension_semantics = [#tpu.dimension_semantics<parallel>], iteration_bounds = array<i64: 1>, scalar_prefetch = 0 : i64, scratch_operands = 0 : i64, tpu.core_type = #tpu.core_type<tc>, window_params = [{transform_indices = @transform_0, window_bounds = array<i64: 16, 1>}, {pipeline_mode = #tpu.pipeline_mode<synchronous>, transform_indices = @transform_1, window_bounds = array<i64: 128, 256>}, {pipeline_mode = #tpu.pipeline_mode<synchronous>, transform_indices = @transform_2, window_bounds = array<i64: 256, 256>}, {pipeline_mode = #tpu.pipeline_mode<synchronous>, transform_indices = @transform_3, window_bounds = array<i64: 1, 256>}, {pipeline_mode = #tpu.pipeline_mode<synchronous>, transform_indices = @transform_4, window_bounds = array<i64: 256, 256>}, {pipeline_mode = #tpu.pipeline_mode<synchronous>, transform_indices = @transform_5, window_bounds = array<i64: 1, 256>}, {transform_indices = @transform_6, window_bounds = array<i64: 16, 256>}]} {
    %c0 = arith.constant 0 : index
    %c0_0 = arith.constant 0 : index
    %0 = vector.load %arg1[%c0, %c0_0] : memref<16x1xi32, #tpu.memory_space<vmem>>, vector<16x1xi32>
    %1 = tpu.iota {dimensions = array<i32: 1>} : vector<16x128xi32>
    %2 = vector.broadcast %0 : vector<16x1xi32> to vector<16x128xi32>
    %3 = arith.cmpi eq, %2, %1 : vector<16x128xi32>
    %4 = arith.extui %3 : vector<16x128xi1> to vector<16x128xi32>
    %5 = arith.sitofp %4 : vector<16x128xi32> to vector<16x128xf32>
    %c0_1 = arith.constant 0 : index
    %c0_2 = arith.constant 0 : index
    %6 = vector.load %arg2[%c0_1, %c0_2] : memref<128x256xf32, #tpu.memory_space<vmem>>, vector<128x256xf32>
    %cst = arith.constant dense<0.000000e+00> : vector<16x256xf32>
    %7 = tpu.matmul %5, %6, %cst {dimension_numbers = #tpu.dot_dimension_numbers<[1], [0], [0], [1], [0, 0, 1, 1], [], []>} : vector<16x128xf32>, vector<128x256xf32>, vector<16x256xf32> -> vector<16x256xf32>
    %c0_3 = arith.constant 0 : index
    %c0_4 = arith.constant 0 : index
    %8 = vector.load %arg3[%c0_3, %c0_4] : memref<256x256xf32, #tpu.memory_space<vmem>>, vector<256x256xf32>
    %cst_5 = arith.constant dense<0.000000e+00> : vector<16x256xf32>
    %9 = tpu.matmul %7, %8, %cst_5 {dimension_numbers = #tpu.dot_dimension_numbers<[1], [0], [0], [1], [0, 0, 1, 1], [], []>} : vector<16x256xf32>, vector<256x256xf32>, vector<16x256xf32> -> vector<16x256xf32>
    %c0_6 = arith.constant 0 : index
    %c0_7 = arith.constant 0 : index
    %10 = vector.load %arg4[%c0_6, %c0_7] : memref<1x256xf32, #tpu.memory_space<vmem>>, vector<1x256xf32>
    %11 = vector.broadcast %10 : vector<1x256xf32> to vector<16x256xf32>
    %12 = arith.addf %9, %11 : vector<16x256xf32>
    %cst_8 = arith.constant 0.000000e+00 : f32
    %13 = vector.broadcast %cst_8 : f32 to vector<16x256xf32>
    %14 = arith.maximumf %12, %13 : vector<16x256xf32>
    %c0_9 = arith.constant 0 : index
    %c0_10 = arith.constant 0 : index
    %15 = vector.load %arg5[%c0_9, %c0_10] : memref<256x256xf32, #tpu.memory_space<vmem>>, vector<256x256xf32>
    %cst_11 = arith.constant dense<0.000000e+00> : vector<16x256xf32>
    %16 = tpu.matmul %14, %15, %cst_11 {dimension_numbers = #tpu.dot_dimension_numbers<[1], [0], [0], [1], [0, 0, 1, 1], [], []>} : vector<16x256xf32>, vector<256x256xf32>, vector<16x256xf32> -> vector<16x256xf32>
    %c0_12 = arith.constant 0 : index
    %c0_13 = arith.constant 0 : index
    %17 = vector.load %arg6[%c0_12, %c0_13] : memref<1x256xf32, #tpu.memory_space<vmem>>, vector<1x256xf32>
    %18 = vector.broadcast %17 : vector<1x256xf32> to vector<16x256xf32>
    %19 = arith.addf %16, %18 : vector<16x256xf32>
    %cst_14 = arith.constant 0.000000e+00 : f32
    %20 = vector.broadcast %cst_14 : f32 to vector<16x256xf32>
    %21 = arith.maximumf %19, %20 : vector<16x256xf32>
    %c0_15 = arith.constant 0 : index
    %c0_16 = arith.constant 0 : index
    %22 = vector.load %arg7[%c0_15, %c0_16] : memref<16x256xf32, #tpu.memory_space<vmem>>, vector<16x256xf32>
    tpu.vector_store %arg7[%c0_15, %c0_16], %21 {strides = array<i32>} : memref<16x256xf32, #tpu.memory_space<vmem>>, vector<16x256xf32>,
    return
  }
  func.func @transform_0(%arg0: i32) -> (i32, i32) {
    %c0_i32 = arith.constant 0 : i32
    %c0_i32_0 = arith.constant 0 : i32
    return %arg0, %c0_i32 : i32, i32
  }
  func.func @transform_1(%arg0: i32) -> (i32, i32) {
    %c0_i32 = arith.constant 0 : i32
    %c0_i32_0 = arith.constant 0 : i32
    %c0_i32_1 = arith.constant 0 : i32
    return %c0_i32, %c0_i32_0 : i32, i32
  }
  func.func @transform_2(%arg0: i32) -> (i32, i32) {
    %c0_i32 = arith.constant 0 : i32
    %c0_i32_0 = arith.constant 0 : i32
    %c0_i32_1 = arith.constant 0 : i32
    return %c0_i32, %c0_i32_0 : i32, i32
  }
  func.func @transform_3(%arg0: i32) -> (i32, i32) {
    %c0_i32 = arith.constant 0 : i32
    %c0_i32_0 = arith.constant 0 : i32
    %c0_i32_1 = arith.constant 0 : i32
    return %c0_i32, %c0_i32_0 : i32, i32
  }
  func.func @transform_4(%arg0: i32) -> (i32, i32) {
    %c0_i32 = arith.constant 0 : i32
    %c0_i32_0 = arith.constant 0 : i32
    %c0_i32_1 = arith.constant 0 : i32
    return %c0_i32, %c0_i32_0 : i32, i32
  }
  func.func @transform_5(%arg0: i32) -> (i32, i32) {
    %c0_i32 = arith.constant 0 : i32
    %c0_i32_0 = arith.constant 0 : i32
    %c0_i32_1 = arith.constant 0 : i32
    return %c0_i32, %c0_i32_0 : i32, i32
  }
  func.func @transform_6(%arg0: i32) -> (i32, i32) {
    %c0_i32 = arith.constant 0 : i32
    %c0_i32_0 = arith.constant 0 : i32
    return %arg0, %c0_i32 : i32, i32
  }
}

</mosaic_0001>

<llo_original>
// kernel: tpu_custom_call.1
$region0: #{tpu_custom_call.1}
  #allocation0 [shape = 'u32[]', space=smem, size = 0x4, offset = 0x4, fixed_abs, tag = 'smem constant byte address 0x4 - core index']
  #allocation1 [shape = 'u32[144,128]{1,0:T(1,128)}', space=vmem, size = 0x12000, scoped, tag = 'internal scratch']
  %s0 = inlined_call_operand.vmem [shape: s32[16,1], index: 0, kind: input, shape index: {}]
  %s1 = inlined_call_operand.hbm [shape: f32[128,256], index: 1, kind: input, shape index: {}]
  %s2 = inlined_call_operand.hbm [shape: f32[256,256], index: 2, kind: input, shape index: {}]
  %s3 = inlined_call_operand.vmem [shape: f32[1,256], index: 3, kind: input, shape index: {}]
  %s4 = inlined_call_operand.hbm [shape: f32[256,256], index: 4, kind: input, shape index: {}]
  %s5 = inlined_call_operand.vmem [shape: f32[1,256], index: 5, kind: input, shape index: {}]
  %s6 = inlined_call_operand.hbm [shape: f32[16,256], index: 6, kind: output, shape index: {}]
  %s7 = sld [smem:[#allocation0]]
  $region46: #{tpu_custom_call.1} parent=0
    _
  %s9 = ssub.s32 1, %s7
  %s10 = scalar_select 0, %s9, %s7
  $region1: #{tpu_custom_call.1} parent=0
    #allocation2 [shape = 'u8[131072]{0}', space=vmem, size = 0x20000, scoped, tag = 'input window, operand 1, single buffered']
    #allocation3 [shape = 's32[1]{0}', space=sflag, size = 0x4, scoped, tag = 'scoped memory for tpu_custom_call.1']
    #allocation4 [shape = 's32[1]{0}', space=sflag, size = 0x4, scoped, tag = 'scoped memory for tpu_custom_call.1']
    #allocation5 [shape = 'u8[262144]{0}', space=vmem, size = 0x40000, scoped, tag = 'input window, operand 2, single buffered']
    #allocation6 [shape = 's32[1]{0}', space=sflag, size = 0x4, scoped, tag = 'scoped memory for tpu_custom_call.1']
    #allocation7 [shape = 'u8[262144]{0}', space=vmem, size = 0x40000, scoped, tag = 'input window, operand 4, single buffered']
    #allocation8 [shape = 'u8[16384]{0}', space=vmem, size = 0x4000, scoped, tag = 'output window, operand 0, single buffered']
    %11 = vsyncpa [#allocation3], 0
    %12 = vsyncpa [#allocation6], 0
    %13 = vsyncpa [#allocation4], 0
    // Predicated region
    $region2: #{tpu_custom_call.1} parent=1 // pred_check
      _
    $region3: #{tpu_custom_call.1} parent=1 // pred_check_branch
      %15 = sbr.rel (0) target = $region5
    $region4: #{tpu_custom_call.1} parent=1 // pred_region
      _
    $region5: #{tpu_custom_call.1} parent=1 // pred_fallthru
      _
    // Predicated region
    $region6: #{tpu_custom_call.1} parent=1 // pred_check
      _
    $region7: #{tpu_custom_call.1} parent=1 // pred_check_branch
      %17 = sbr.rel (0) target = $region9
    $region8: #{tpu_custom_call.1} parent=1 // pred_region
      %s19 = ssub.s32 4096, 4096
      %20 = vsyncadd [#allocation3], %s19
      %s21 = sshll.u32 [#allocation2], 4
      %s22 = int_to_ptr.vmem [resolvable:$true] %s21
      %27 = dma.hbm_to_vmem [thread:$0]  %s1, 4096, %s22, [#allocation3], 256, 256, 16
    $region9: #{tpu_custom_call.1} parent=1 // pred_fallthru
      _
    // Predicated region
    $region10: #{tpu_custom_call.1} parent=1 // pred_check
      _
    $region11: #{tpu_custom_call.1} parent=1 // pred_check_branch
      %29 = sbr.rel (0) target = $region13
    $region12: #{tpu_custom_call.1} parent=1 // pred_region
      %s31 = ssub.s32 8192, 8192
      %32 = vsyncadd [#allocation6], %s31
      %s33 = sshll.u32 [#allocation5], 4
      %s34 = int_to_ptr.vmem [resolvable:$true] %s33
      %39 = dma.hbm_to_vmem [thread:$0]  %s2, 8192, %s34, [#allocation6], 256, 256, 16
    $region13: #{tpu_custom_call.1} parent=1 // pred_fallthru
      _
    // Predicated region
    $region14: #{tpu_custom_call.1} parent=1 // pred_check
      _
    $region15: #{tpu_custom_call.1} parent=1 // pred_check_branch
      %41 = sbr.rel (0) target = $region17
    $region16: #{tpu_custom_call.1} parent=1 // pred_region
      _
    $region17: #{tpu_custom_call.1} parent=1 // pred_fallthru
      _
    // Predicated region
    $region18: #{tpu_custom_call.1} parent=1 // pred_check
      _
    $region19: #{tpu_custom_call.1} parent=1 // pred_check_branch
      %43 = sbr.rel (0) target = $region21
    $region20: #{tpu_custom_call.1} parent=1 // pred_region
      %s45 = ssub.s32 8192, 8192
      %46 = vsyncadd [#allocation6], %s45
      %s47 = sshll.u32 [#allocation7], 4
      %s48 = int_to_ptr.vmem [resolvable:$true] %s47
      %53 = dma.hbm_to_vmem [thread:$0]  %s4, 8192, %s48, [#allocation6], 256, 256, 16
    $region21: #{tpu_custom_call.1} parent=1 // pred_fallthru
      _
    // Predicated region
    $region22: #{tpu_custom_call.1} parent=1 // pred_check
      _
    $region23: #{tpu_custom_call.1} parent=1 // pred_check_branch
      %55 = sbr.rel (0) target = $region25
    $region24: #{tpu_custom_call.1} parent=1 // pred_region
      _
    $region25: #{tpu_custom_call.1} parent=1 // pred_fallthru
      _
    // Predicated region
    $region26: #{tpu_custom_call.1} parent=1 // pred_check
      _
    $region27: #{tpu_custom_call.1} parent=1 // pred_check_branch
      %57 = sbr.rel (0) target = $region29
    $region28: #{tpu_custom_call.1} parent=1 // pred_region
      %58 = dma.done [#allocation3], 4096
    $region29: #{tpu_custom_call.1} parent=1 // pred_fallthru
      _
    // Predicated region
    $region30: #{tpu_custom_call.1} parent=1 // pred_check
      _
    $region31: #{tpu_custom_call.1} parent=1 // pred_check_branch
      %60 = sbr.rel (0) target = $region33
    $region32: #{tpu_custom_call.1} parent=1 // pred_region
      %61 = dma.done [#allocation6], 8192
    $region33: #{tpu_custom_call.1} parent=1 // pred_fallthru
      _
    // Predicated region
    $region34: #{tpu_custom_call.1} parent=1 // pred_check
      _
    $region35: #{tpu_custom_call.1} parent=1 // pred_check_branch
      %63 = sbr.rel (0) target = $region37
    $region36: #{tpu_custom_call.1} parent=1 // pred_region
      %64 = dma.done [#allocation6], 8192
    $region37: #{tpu_custom_call.1} parent=1 // pred_fallthru
      _
    %v65 = vld [vmem:[%s0] sm:$0xff]
    %v66 = vld [vmem:[%s0 + $0x8] sm:$0xff]
    %v67 = vlaneseq
    %v68 = vand.u32 %v67, 127
    %69 = vset.pattern.permute.xlu0 0
    %70 = vperm.xlu0 %69, %v65
    %v71 = vpop.permute.xlu0 %70
    %72 = vset.pattern.permute.xlu0 0
    %73 = vperm.xlu0 %72, %v66
    %v74 = vpop.permute.xlu0 %73
    %vm75 = vcmp.eq.s32.totalorder %v71, %v68
    %vm76 = vcmp.eq.s32.totalorder %v74, %v68
    %v77 = vsel %vm75, 1, 0
    %v78 = vsel %vm76, 1, 0
    %v79 = vcvt.s32.f32 %v77
    %v80 = vcvt.s32.f32 %v78
    %v81 = vld [vmem:[#allocation2] sm:$0xff]
    %v82 = vld [vmem:[#allocation2 + $0x8] sm:$0xff]
    %v83 = vld [vmem:[#allocation2 + $0x10] sm:$0xff]
    %v84 = vld [vmem:[#allocation2 + $0x18] sm:$0xff]
    %v85 = vld [vmem:[#allocation2 + $0x20] sm:$0xff]
    %v86 = vld [vmem:[#allocation2 + $0x28] sm:$0xff]
    %v87 = vld [vmem:[#allocation2 + $0x30] sm:$0xff]
    %v88 = vld [vmem:[#allocation2 + $0x38] sm:$0xff]
    %v89 = vld [vmem:[#allocation2 + $0x40] sm:$0xff]
    %v90 = vld [vmem:[#allocation2 + $0x48] sm:$0xff]
    %v91 = vld [vmem:[#allocation2 + $0x50] sm:$0xff]
    %v92 = vld [vmem:[#allocation2 + $0x58] sm:$0xff]
    %v93 = vld [vmem:[#allocation2 + $0x60] sm:$0xff]
    %v94 = vld [vmem:[#allocation2 + $0x68] sm:$0xff]
    %v95 = vld [vmem:[#allocation2 + $0x70] sm:$0xff]
    %v96 = vld [vmem:[#allocation2 + $0x78] sm:$0xff]
    %v97 = vld [vmem:[#allocation2 + $0x80] sm:$0xff]
    %v98 = vld [vmem:[#allocation2 + $0x88] sm:$0xff]
    %v99 = vld [vmem:[#allocation2 + $0x90] sm:$0xff]
    %v100 = vld [vmem:[#allocation2 + $0x98] sm:$0xff]
    %v101 = vld [vmem:[#allocation2 + $0xa0] sm:$0xff]
    %v102 = vld [vmem:[#allocation2 + $0xa8] sm:$0xff]
    %v103 = vld [vmem:[#allocation2 + $0xb0] sm:$0xff]
    %v104 = vld [vmem:[#allocation2 + $0xb8] sm:$0xff]
    %v105 = vld [vmem:[#allocation2 + $0xc0] sm:$0xff]
    %v106 = vld [vmem:[#allocation2 + $0xc8] sm:$0xff]
    %v107 = vld [vmem:[#allocation2 + $0xd0] sm:$0xff]
    %v108 = vld [vmem:[#allocation2 + $0xd8] sm:$0xff]
    %v109 = vld [vmem:[#allocation2 + $0xe0] sm:$0xff]
    %v110 = vld [vmem:[#allocation2 + $0xe8] sm:$0xff]
    %v111 = vld [vmem:[#allocation2 + $0xf0] sm:$0xff]
    %v112 = vld [vmem:[#allocation2 + $0xf8] sm:$0xff]
    %113 = vmatprep.subr.mxu0 %v82
    %114 = vmatpush1.msra.mxu0 %v81
    %115 = vmatprep.subr.mxu0 %v84
    %116 = vmatpush1.msra.mxu0 %v83
    %117 = vmatprep.subr.mxu0 %v86
    %118 = vmatpush1.msra.mxu0 %v85
    %119 = vmatprep.subr.mxu0 %v88
    %120 = vmatpush1.msra.mxu0 %v87
    %121 = vmatprep.subr.mxu0 %v90
    %122 = vmatpush1.msra.mxu0 %v89
    %123 = vmatprep.subr.mxu0 %v92
    %124 = vmatpush1.msra.mxu0 %v91
    %125 = vmatprep.subr.mxu0 %v94
    %126 = vmatpush1.msra.mxu0 %v93
    %127 = vmatprep.subr.mxu0 %v96
    %128 = vmatpush1.msra.mxu0 %v95
    %129 = vmatprep.subr.mxu0 %v98
    %130 = vmatpush1.msra.mxu0 %v97
    %131 = vmatprep.subr.mxu0 %v100
    %132 = vmatpush1.msra.mxu0 %v99
    %133 = vmatprep.subr.mxu0 %v102
    %134 = vmatpush1.msra.mxu0 %v101
    %135 = vmatprep.subr.mxu0 %v104
    %136 = vmatpush1.msra.mxu0 %v103
    %137 = vmatprep.subr.mxu0 %v106
    %138 = vmatpush1.msra.mxu0 %v105
    %139 = vmatprep.subr.mxu0 %v108
    %140 = vmatpush1.msra.mxu0 %v107
    %141 = vmatprep.subr.mxu0 %v110
    %142 = vmatpush1.msra.mxu0 %v109
    %143 = vmatprep.subr.mxu0 %v112
    %144 = vmatpush1.msra.mxu0 %v111
    %145 = vmatprep.subr.mxu0 0.0
    %146 = vmatpush1.msra.mxu0 0.0
    %147 = vmatprep.subr.mxu0 0.0
    %148 = vmatpush1.msra.mxu0 0.0
    %149 = vmatprep.subr.mxu0 0.0
    %150 = vmatpush1.msra.mxu0 0.0
    %151 = vmatprep.subr.mxu0 0.0
    %152 = vmatpush1.msra.mxu0 0.0
    %153 = vmatprep.subr.mxu0 0.0
    %154 = vmatpush1.msra.mxu0 0.0
    %155 = vmatprep.subr.mxu0 0.0
    %156 = vmatpush1.msra.mxu0 0.0
    %157 = vmatprep.subr.mxu0 0.0
    %158 = vmatpush1.msra.mxu0 0.0
    %159 = vmatprep.subr.mxu0 0.0
    %160 = vmatpush1.msra.mxu0 0.0
    %161 = vmatprep.subr.mxu0 0.0
    %162 = vmatpush1.msra.mxu0 0.0
    %163 = vmatprep.subr.mxu0 0.0
    %164 = vmatpush1.msra.mxu0 0.0
    %165 = vmatprep.subr.mxu0 0.0
    %166 = vmatpush1.msra.mxu0 0.0
    %167 = vmatprep.subr.mxu0 0.0
    %168 = vmatpush1.msra.mxu0 0.0
    %169 = vmatprep.subr.mxu0 0.0
    %170 = vmatpush1.msra.mxu0 0.0
    %171 = vmatprep.subr.mxu0 0.0
    %172 = vmatpush1.msra.mxu0 0.0
    %173 = vmatprep.subr.mxu0 0.0
    %174 = vmatpush1.msra.mxu0 0.0
    %175 = vmatprep.subr.mxu0 0.0
    %176 = vmatpush1.msra.mxu0 0.0
    %177 = vmatprep.mubr.f32.mxu0 0.0
    %178 = vmatmul.mubr.f32.gmra.mrb[0].mxu0 %v79
    %v179 = vpop.f32.mrb[0].mxu0
    %v180 = vadd.f32 0.0, %v179
    %v181 = vpop.f32.mrb[0].mxu0
    %v182 = vadd.f32 0.0, %v181
    %183 = vmatprep.mubr.f32.mxu0 0.0
    %184 = vmatmul.mubr.f32.gmra.mrb[0].mxu0 %v80
    %v185 = vpop.f32.mrb[0].mxu0
    %v186 = vadd.f32 0.0, %v185
    %v187 = vpop.f32.mrb[0].mxu0
    %v188 = vadd.f32 0.0, %v187
    %189 = vdwg.mxu0
    %v190 = vld [vmem:[#allocation5] sm:$0xff]
    %v191 = vld [vmem:[#allocation5 + $0x8] sm:$0xff]
    %v192 = vld [vmem:[#allocation5 + $0x10] sm:$0xff]
    %v193 = vld [vmem:[#allocation5 + $0x18] sm:$0xff]
    %v194 = vld [vmem:[#allocation5 + $0x20] sm:$0xff]
    %v195 = vld [vmem:[#allocation5 + $0x28] sm:$0xff]
    %v196 = vld [vmem:[#allocation5 + $0x30] sm:$0xff]
    %v197 = vld [vmem:[#allocation5 + $0x38] sm:$0xff]
    %v198 = vld [vmem:[#allocation5 + $0x40] sm:$0xff]
    %v199 = vld [vmem:[#allocation5 + $0x48] sm:$0xff]
    %v200 = vld [vmem:[#allocation5 + $0x50] sm:$0xff]
    %v201 = vld [vmem:[#allocation5 + $0x58] sm:$0xff]
    %v202 = vld [vmem:[#allocation5 + $0x60] sm:$0xff]
    %v203 = vld [vmem:[#allocation5 + $0x68] sm:$0xff]
    %v204 = vld [vmem:[#allocation5 + $0x70] sm:$0xff]
    %v205 = vld [vmem:[#allocation5 + $0x78] sm:$0xff]
    %v206 = vld [vmem:[#allocation5 + $0x80] sm:$0xff]
    %v207 = vld [vmem:[#allocation5 + $0x88] sm:$0xff]
    %v208 = vld [vmem:[#allocation5 + $0x90] sm:$0xff]
    %v209 = vld [vmem:[#allocation5 + $0x98] sm:$0xff]
    %v210 = vld [vmem:[#allocation5 + $0xa0] sm:$0xff]
    %v211 = vld [vmem:[#allocation5 + $0xa8] sm:$0xff]
    %v212 = vld [vmem:[#allocation5 + $0xb0] sm:$0xff]
    %v213 = vld [vmem:[#allocation5 + $0xb8] sm:$0xff]
    %v214 = vld [vmem:[#allocation5 + $0xc0] sm:$0xff]
    %v215 = vld [vmem:[#allocation5 + $0xc8] sm:$0xff]
    %v216 = vld [vmem:[#allocation5 + $0xd0] sm:$0xff]
    %v217 = vld [vmem:[#allocation5 + $0xd8] sm:$0xff]
    %v218 = vld [vmem:[#allocation5 + $0xe0] sm:$0xff]
    %v219 = vld [vmem:[#allocation5 + $0xe8] sm:$0xff]
    %v220 = vld [vmem:[#allocation5 + $0xf0] sm:$0xff]
    %v221 = vld [vmem:[#allocation5 + $0xf8] sm:$0xff]
    %v222 = vld [vmem:[#allocation5 + $0x100] sm:$0xff]
    %v223 = vld [vmem:[#allocation5 + $0x108] sm:$0xff]
    %v224 = vld [vmem:[#allocation5 + $0x110] sm:$0xff]
    %v225 = vld [vmem:[#allocation5 + $0x118] sm:$0xff]
    %v226 = vld [vmem:[#allocation5 + $0x120] sm:$0xff]
    %v227 = vld [vmem:[#allocation5 + $0x128] sm:$0xff]
    %v228 = vld [vmem:[#allocation5 + $0x130] sm:$0xff]
    %v229 = vld [vmem:[#allocation5 + $0x138] sm:$0xff]
    %v230 = vld [vmem:[#allocation5 + $0x140] sm:$0xff]
    %v231 = vld [vmem:[#allocation5 + $0x148] sm:$0xff]
    %v232 = vld [vmem:[#allocation5 + $0x150] sm:$0xff]
    %v233 = vld [vmem:[#allocation5 + $0x158] sm:$0xff]
    %v234 = vld [vmem:[#allocation5 + $0x160] sm:$0xff]
    %v235 = vld [vmem:[#allocation5 + $0x168] sm:$0xff]
    %v236 = vld [vmem:[#allocation5 + $0x170] sm:$0xff]
    %v237 = vld [vmem:[#allocation5 + $0x178] sm:$0xff]
    %v238 = vld [vmem:[#allocation5 + $0x180] sm:$0xff]
    %v239 = vld [vmem:[#allocation5 + $0x188] sm:$0xff]
    %v240 = vld [vmem:[#allocation5 + $0x190] sm:$0xff]
    %v241 = vld [vmem:[#allocation5 + $0x198] sm:$0xff]
    %v242 = vld [vmem:[#allocation5 + $0x1a0] sm:$0xff]
    %v243 = vld [vmem:[#allocation5 + $0x1a8] sm:$0xff]
    %v244 = vld [vmem:[#allocation5 + $0x1b0] sm:$0xff]
    %v245 = vld [vmem:[#allocation5 + $0x1b8] sm:$0xff]
    %v246 = vld [vmem:[#allocation5 + $0x1c0] sm:$0xff]
    %v247 = vld [vmem:[#allocation5 + $0x1c8] sm:$0xff]
    %v248 = vld [vmem:[#allocation5 + $0x1d0] sm:$0xff]
    %v249 = vld [vmem:[#allocation5 + $0x1d8] sm:$0xff]
    %v250 = vld [vmem:[#allocation5 + $0x1e0] sm:$0xff]
    %v251 = vld [vmem:[#allocation5 + $0x1e8] sm:$0xff]
    %v252 = vld [vmem:[#allocation5 + $0x1f0] sm:$0xff]
    %v253 = vld [vmem:[#allocation5 + $0x1f8] sm:$0xff]
    %v254 = vld [vmem:[%s3] sm:$0x3]
    %v256 = vlaneseq
    %v257 = vshrl.u32 %v256, 7
    %v258 = vsub.s32 0, %v257
    %v259 = vrot.slane %v254, %v258
    %v260 = vlaneseq
    %v261 = vshrl.u32 %v260, 7
    %v262 = vsub.s32 1, %v261
    %v263 = vrot.slane %v254, %v262
    %266 = vmatprep.subr.mxu0 %v191
    %267 = vmatpush1.msra.mxu0 %v190
    %268 = vmatprep.subr.mxu0 %v193
    %269 = vmatpush1.msra.mxu0 %v192
    %270 = vmatprep.subr.mxu0 %v195
    %271 = vmatpush1.msra.mxu0 %v194
    %272 = vmatprep.subr.mxu0 %v197
    %273 = vmatpush1.msra.mxu0 %v196
    %274 = vmatprep.subr.mxu0 %v199
    %275 = vmatpush1.msra.mxu0 %v198
    %276 = vmatprep.subr.mxu0 %v201
    %277 = vmatpush1.msra.mxu0 %v200
    %278 = vmatprep.subr.mxu0 %v203
    %279 = vmatpush1.msra.mxu0 %v202
    %280 = vmatprep.subr.mxu0 %v205
    %281 = vmatpush1.msra.mxu0 %v204
    %282 = vmatprep.subr.mxu0 %v207
    %283 = vmatpush1.msra.mxu0 %v206
    %284 = vmatprep.subr.mxu0 %v209
    %285 = vmatpush1.msra.mxu0 %v208
    %286 = vmatprep.subr.mxu0 %v211
    %287 = vmatpush1.msra.mxu0 %v210
    %288 = vmatprep.subr.mxu0 %v213
    %289 = vmatpush1.msra.mxu0 %v212
    %290 = vmatprep.subr.mxu0 %v215
    %291 = vmatpush1.msra.mxu0 %v214
    %292 = vmatprep.subr.mxu0 %v217
    %293 = vmatpush1.msra.mxu0 %v216
    %294 = vmatprep.subr.mxu0 %v219
    %295 = vmatpush1.msra.mxu0 %v218
    %296 = vmatprep.subr.mxu0 %v221
    %297 = vmatpush1.msra.mxu0 %v220
    %298 = vmatprep.subr.mxu0 %v223
    %299 = vmatpush1.msra.mxu0 %v222
    %300 = vmatprep.subr.mxu0 %v225
    %301 = vmatpush1.msra.mxu0 %v224
    %302 = vmatprep.subr.mxu0 %v227
    %303 = vmatpush1.msra.mxu0 %v226
    %304 = vmatprep.subr.mxu0 %v229
    %305 = vmatpush1.msra.mxu0 %v228
    %306 = vmatprep.subr.mxu0 %v231
    %307 = vmatpush1.msra.mxu0 %v230
    %308 = vmatprep.subr.mxu0 %v233
    %309 = vmatpush1.msra.mxu0 %v232
    %310 = vmatprep.subr.mxu0 %v235
    %311 = vmatpush1.msra.mxu0 %v234
    %312 = vmatprep.subr.mxu0 %v237
    %313 = vmatpush1.msra.mxu0 %v236
    %314 = vmatprep.subr.mxu0 %v239
    %315 = vmatpush1.msra.mxu0 %v238
    %316 = vmatprep.subr.mxu0 %v241
    %317 = vmatpush1.msra.mxu0 %v240
    %318 = vmatprep.subr.mxu0 %v243
    %319 = vmatpush1.msra.mxu0 %v242
    %320 = vmatprep.subr.mxu0 %v245
    %321 = vmatpush1.msra.mxu0 %v244
    %322 = vmatprep.subr.mxu0 %v247
    %323 = vmatpush1.msra.mxu0 %v246
    %324 = vmatprep.subr.mxu0 %v249
    %325 = vmatpush1.msra.mxu0 %v248
    %326 = vmatprep.subr.mxu0 %v251
    %327 = vmatpush1.msra.mxu0 %v250
    %328 = vmatprep.subr.mxu0 %v253
    %329 = vmatpush1.msra.mxu0 %v252
    %330 = vmatprep.mubr.f32.mxu0 %v182
    %331 = vmatmul.mubr.f32.gmra.mrb[0].mxu0 %v180
    %v332 = vpop.f32.mrb[0].mxu0
    %v333 = vadd.f32 %v259, %v332
    %v334 = vpop.f32.mrb[0].mxu0
    %v335 = vadd.f32 %v263, %v334
    %336 = vmatprep.mubr.f32.mxu0 %v188
    %337 = vmatmul.mubr.f32.gmra.mrb[0].mxu0 %v186
    %v338 = vpop.f32.mrb[0].mxu0
    %v339 = vadd.f32 %v259, %v338
    %v340 = vpop.f32.mrb[0].mxu0
    %v341 = vadd.f32 %v263, %v340
    %342 = vdwg.mxu0
    %v343 = vmax.f32 %v333, 0.0
    %v344 = vmax.f32 %v335, 0.0
    %v345 = vmax.f32 %v339, 0.0
    %v346 = vmax.f32 %v341, 0.0
    %v347 = vld [vmem:[#allocation7] sm:$0xff]
    %v348 = vld [vmem:[#allocation7 + $0x8] sm:$0xff]
    %v349 = vld [vmem:[#allocation7 + $0x10] sm:$0xff]
    %v350 = vld [vmem:[#allocation7 + $0x18] sm:$0xff]
    %v351 = vld [vmem:[#allocation7 + $0x20] sm:$0xff]
    %v352 = vld [vmem:[#allocation7 + $0x28] sm:$0xff]
    %v353 = vld [vmem:[#allocation7 + $0x30] sm:$0xff]
    %v354 = vld [vmem:[#allocation7 + $0x38] sm:$0xff]
    %v355 = vld [vmem:[#allocation7 + $0x40] sm:$0xff]
    %v356 = vld [vmem:[#allocation7 + $0x48] sm:$0xff]
    %v357 = vld [vmem:[#allocation7 + $0x50] sm:$0xff]
    %v358 = vld [vmem:[#allocation7 + $0x58] sm:$0xff]
    %v359 = vld [vmem:[#allocation7 + $0x60] sm:$0xff]
    %v360 = vld [vmem:[#allocation7 + $0x68] sm:$0xff]
    %v361 = vld [vmem:[#allocation7 + $0x70] sm:$0xff]
    %v362 = vld [vmem:[#allocation7 + $0x78] sm:$0xff]
    %v363 = vld [vmem:[#allocation7 + $0x80] sm:$0xff]
    %v364 = vld [vmem:[#allocation7 + $0x88] sm:$0xff]
    %v365 = vld [vmem:[#allocation7 + $0x90] sm:$0xff]
    %v366 = vld [vmem:[#allocation7 + $0x98] sm:$0xff]
    %v367 = vld [vmem:[#allocation7 + $0xa0] sm:$0xff]
    %v368 = vld [vmem:[#allocation7 + $0xa8] sm:$0xff]
    %v369 = vld [vmem:[#allocation7 + $0xb0] sm:$0xff]
    %v370 = vld [vmem:[#allocation7 + $0xb8] sm:$0xff]
    %v371 = vld [vmem:[#allocation7 + $0xc0] sm:$0xff]
    %v372 = vld [vmem:[#allocation7 + $0xc8] sm:$0xff]
    %v373 = vld [vmem:[#allocation7 + $0xd0] sm:$0xff]
    %v374 = vld [vmem:[#allocation7 + $0xd8] sm:$0xff]
    %v375 = vld [vmem:[#allocation7 + $0xe0] sm:$0xff]
    %v376 = vld [vmem:[#allocation7 + $0xe8] sm:$0xff]
    %v377 = vld [vmem:[#allocation7 + $0xf0] sm:$0xff]
    %v378 = vld [vmem:[#allocation7 + $0xf8] sm:$0xff]
    %v379 = vld [vmem:[#allocation7 + $0x100] sm:$0xff]
    %v380 = vld [vmem:[#allocation7 + $0x108] sm:$0xff]
    %v381 = vld [vmem:[#allocation7 + $0x110] sm:$0xff]
    %v382 = vld [vmem:[#allocation7 + $0x118] sm:$0xff]
    %v383 = vld [vmem:[#allocation7 + $0x120] sm:$0xff]
    %v384 = vld [vmem:[#allocation7 + $0x128] sm:$0xff]
    %v385 = vld [vmem:[#allocation7 + $0x130] sm:$0xff]
    %v386 = vld [vmem:[#allocation7 + $0x138] sm:$0xff]
    %v387 = vld [vmem:[#allocation7 + $0x140] sm:$0xff]
    %v388 = vld [vmem:[#allocation7 + $0x148] sm:$0xff]
    %v389 = vld [vmem:[#allocation7 + $0x150] sm:$0xff]
    %v390 = vld [vmem:[#allocation7 + $0x158] sm:$0xff]
    %v391 = vld [vmem:[#allocation7 + $0x160] sm:$0xff]
    %v392 = vld [vmem:[#allocation7 + $0x168] sm:$0xff]
    %v393 = vld [vmem:[#allocation7 + $0x170] sm:$0xff]
    %v394 = vld [vmem:[#allocation7 + $0x178] sm:$0xff]
    %v395 = vld [vmem:[#allocation7 + $0x180] sm:$0xff]
    %v396 = vld [vmem:[#allocation7 + $0x188] sm:$0xff]
    %v397 = vld [vmem:[#allocation7 + $0x190] sm:$0xff]
    %v398 = vld [vmem:[#allocation7 + $0x198] sm:$0xff]
    %v399 = vld [vmem:[#allocation7 + $0x1a0] sm:$0xff]
    %v400 = vld [vmem:[#allocation7 + $0x1a8] sm:$0xff]
    %v401 = vld [vmem:[#allocation7 + $0x1b0] sm:$0xff]
    %v402 = vld [vmem:[#allocation7 + $0x1b8] sm:$0xff]
    %v403 = vld [vmem:[#allocation7 + $0x1c0] sm:$0xff]
    %v404 = vld [vmem:[#allocation7 + $0x1c8] sm:$0xff]
    %v405 = vld [vmem:[#allocation7 + $0x1d0] sm:$0xff]
    %v406 = vld [vmem:[#allocation7 + $0x1d8] sm:$0xff]
    %v407 = vld [vmem:[#allocation7 + $0x1e0] sm:$0xff]
    %v408 = vld [vmem:[#allocation7 + $0x1e8] sm:$0xff]
    %v409 = vld [vmem:[#allocation7 + $0x1f0] sm:$0xff]
    %v410 = vld [vmem:[#allocation7 + $0x1f8] sm:$0xff]
    %v411 = vld [vmem:[%s5] sm:$0x3]
    %v413 = vlaneseq
    %v414 = vshrl.u32 %v413, 7
    %v415 = vsub.s32 0, %v414
    %v416 = vrot.slane %v411, %v415
    %v417 = vlaneseq
    %v418 = vshrl.u32 %v417, 7
    %v419 = vsub.s32 1, %v418
    %v420 = vrot.slane %v411, %v419
    %423 = vmatprep.subr.mxu0 %v348
    %424 = vmatpush1.msra.mxu0 %v347
    %425 = vmatprep.subr.mxu0 %v350
    %426 = vmatpush1.msra.mxu0 %v349
    %427 = vmatprep.subr.mxu0 %v352
    %428 = vmatpush1.msra.mxu0 %v351
    %429 = vmatprep.subr.mxu0 %v354
    %430 = vmatpush1.msra.mxu0 %v353
    %431 = vmatprep.subr.mxu0 %v356
    %432 = vmatpush1.msra.mxu0 %v355
    %433 = vmatprep.subr.mxu0 %v358
    %434 = vmatpush1.msra.mxu0 %v357
    %435 = vmatprep.subr.mxu0 %v360
    %436 = vmatpush1.msra.mxu0 %v359
    %437 = vmatprep.subr.mxu0 %v362
    %438 = vmatpush1.msra.mxu0 %v361
    %439 = vmatprep.subr.mxu0 %v364
    %440 = vmatpush1.msra.mxu0 %v363
    %441 = vmatprep.subr.mxu0 %v366
    %442 = vmatpush1.msra.mxu0 %v365
    %443 = vmatprep.subr.mxu0 %v368
    %444 = vmatpush1.msra.mxu0 %v367
    %445 = vmatprep.subr.mxu0 %v370
    %446 = vmatpush1.msra.mxu0 %v369
    %447 = vmatprep.subr.mxu0 %v372
    %448 = vmatpush1.msra.mxu0 %v371
    %449 = vmatprep.subr.mxu0 %v374
    %450 = vmatpush1.msra.mxu0 %v373
    %451 = vmatprep.subr.mxu0 %v376
    %452 = vmatpush1.msra.mxu0 %v375
    %453 = vmatprep.subr.mxu0 %v378
    %454 = vmatpush1.msra.mxu0 %v377
    %455 = vmatprep.subr.mxu0 %v380
    %456 = vmatpush1.msra.mxu0 %v379
    %457 = vmatprep.subr.mxu0 %v382
    %458 = vmatpush1.msra.mxu0 %v381
    %459 = vmatprep.subr.mxu0 %v384
    %460 = vmatpush1.msra.mxu0 %v383
    %461 = vmatprep.subr.mxu0 %v386
    %462 = vmatpush1.msra.mxu0 %v385
    %463 = vmatprep.subr.mxu0 %v388
    %464 = vmatpush1.msra.mxu0 %v387
    %465 = vmatprep.subr.mxu0 %v390
    %466 = vmatpush1.msra.mxu0 %v389
    %467 = vmatprep.subr.mxu0 %v392
    %468 = vmatpush1.msra.mxu0 %v391
    %469 = vmatprep.subr.mxu0 %v394
    %470 = vmatpush1.msra.mxu0 %v393
    %471 = vmatprep.subr.mxu0 %v396
    %472 = vmatpush1.msra.mxu0 %v395
    %473 = vmatprep.subr.mxu0 %v398
    %474 = vmatpush1.msra.mxu0 %v397
    %475 = vmatprep.subr.mxu0 %v400
    %476 = vmatpush1.msra.mxu0 %v399
    %477 = vmatprep.subr.mxu0 %v402
    %478 = vmatpush1.msra.mxu0 %v401
    %479 = vmatprep.subr.mxu0 %v404
    %480 = vmatpush1.msra.mxu0 %v403
    %481 = vmatprep.subr.mxu0 %v406
    %482 = vmatpush1.msra.mxu0 %v405
    %483 = vmatprep.subr.mxu0 %v408
    %484 = vmatpush1.msra.mxu0 %v407
    %485 = vmatprep.subr.mxu0 %v410
    %486 = vmatpush1.msra.mxu0 %v409
    %487 = vmatprep.mubr.f32.mxu0 %v344
    %488 = vmatmul.mubr.f32.gmra.mrb[0].mxu0 %v343
    %v489 = vpop.f32.mrb[0].mxu0
    %v490 = vadd.f32 %v416, %v489
    %v491 = vpop.f32.mrb[0].mxu0
    %v492 = vadd.f32 %v420, %v491
    %493 = vmatprep.mubr.f32.mxu0 %v346
    %494 = vmatmul.mubr.f32.gmra.mrb[0].mxu0 %v345
    %v495 = vpop.f32.mrb[0].mxu0
    %v496 = vadd.f32 %v416, %v495
    %v497 = vpop.f32.mrb[0].mxu0
    %v498 = vadd.f32 %v420, %v497
    %499 = vdwg.mxu0
    %v500 = vmax.f32 %v490, 0.0
    %v501 = vmax.f32 %v492, 0.0
    %v502 = vmax.f32 %v496, 0.0
    %v503 = vmax.f32 %v498, 0.0
    %504 = vst [vmem:[#allocation8] sm:$0xff] %v500
    %505 = vst [vmem:[#allocation8 + $0x8] sm:$0xff] %v501
    %506 = vst [vmem:[#allocation8 + $0x10] sm:$0xff] %v502
    %507 = vst [vmem:[#allocation8 + $0x18] sm:$0xff] %v503
    // Predicated region
    $region38: #{tpu_custom_call.1} parent=1 // pred_check
      _
    $region39: #{tpu_custom_call.1} parent=1 // pred_check_branch
      %509 = sbr.rel (0) target = $region41
    $region40: #{tpu_custom_call.1} parent=1 // pred_region
      %s511 = ssub.s32 512, 512
      %512 = vsyncadd [#allocation4], %s511
      %s513 = sshll.u32 [#allocation8], 4
      %s514 = int_to_ptr.vmem [resolvable:$true] %s513
      %519 = dma.vmem_to_hbm [thread:$0]  %s514, 512, %s6, [#allocation4], 256, 256, 16
    $region41: #{tpu_custom_call.1} parent=1 // pred_fallthru
      _
    // Predicated region
    $region42: #{tpu_custom_call.1} parent=1 // pred_check
      _
    $region43: #{tpu_custom_call.1} parent=1 // pred_check_branch
      %521 = sbr.rel (0) target = $region45
    $region44: #{tpu_custom_call.1} parent=1 // pred_region
      %522 = dma.done [#allocation4], 512
    $region45: #{tpu_custom_call.1} parent=1 // pred_fallthru
      _
    %523 = vsyncpa [#allocation3], 1
    %524 = vsyncpa [#allocation6], 1
    %525 = vsyncpa [#allocation4], 1

</llo_original>
